<compile_context>
chip_gen: v6e
topology: v6e:2x2x1
jax: 0.10.0
libtpu: 0.0.40
codegen_flags: <defaults>
</compile_context>

<pallas_src>
import jax
import jax.numpy as jnp
from jax.experimental import pallas as pl
from jax.experimental.pallas import tpu as pltpu

EPS = 1e-5  # PyTorch nn.LayerNorm default


def _ln_matmul(xe, xo, we_ref, wo_ref, bias_ref, o_ref):
    """Shared math. xe holds [x0|x2] per token, xo holds [x1|x3].

    xe, xo:          (TM, 2C) values
    we_ref, wo_ref:  (2C, Dp) gamma-folded weight chunks (grid-resident)
    bias_ref:        (1, Dp)  = beta @ W^T (f32)
    o_ref:           (TM, Dp)
    """
    c4 = xe.shape[-1] + xo.shape[-1]            # == 4*C
    inv_c4 = 1.0 / c4
    xe = xe.astype(jnp.float32)
    xo = xo.astype(jnp.float32)
    # one pass over the lanes: sum and sum-of-squares together
    s1 = jnp.sum(xe, axis=-1, keepdims=True) + jnp.sum(xo, axis=-1, keepdims=True)
    s2 = (jnp.sum(xe * xe, axis=-1, keepdims=True)
          + jnp.sum(xo * xo, axis=-1, keepdims=True))
    mean = s1 * inv_c4
    var = s2 * inv_c4 - mean * mean             # biased variance, like torch
    inv = jax.lax.rsqrt(var + EPS)
    ye = ((xe - mean) * inv).astype(we_ref.dtype)   # MXU operands in weight dtype
    yo = ((xo - mean) * inv).astype(wo_ref.dtype)
    acc = jnp.dot(ye, we_ref[...], preferred_element_type=jnp.float32)
    acc = acc + jnp.dot(yo, wo_ref[...], preferred_element_type=jnp.float32)
    acc = acc + bias_ref[...]
    o_ref[...] = acc.astype(o_ref.dtype)


def _merge_kernel_fused(x_ref, we_ref, wo_ref, bias_ref, o_ref):
    """x_ref: (TR, 2, Wo, 2C) -- TR output rows x (even/odd H row) x Wo cols."""
    tr, _, wo, c2 = x_ref.shape
    tm = tr * wo
    xv = x_ref[...]
    xe = xv[:, 0, :, :].reshape(tm, c2)   # [x0 | x2]  (even H row)
    xo = xv[:, 1, :, :].reshape(tm, c2)   # [x1 | x3]  (odd  H row)
    _ln_matmul(xe, xo, we_ref, wo_ref, bias_ref, o_ref)


def _merge_kernel_2d(xe_ref, xo_ref, we_ref, wo_ref, bias_ref, o_ref):
    _ln_matmul(xe_ref[...], xo_ref[...], we_ref, wo_ref, bias_ref, o_ref)


def _round_up(v, m):
    return (v + m - 1) // m * m


def patch_merging_2d(x, gamma, beta, w_red, *, target_tokens=1024):
    """Pallas implementation of PatchMerging2D.forward.

    x:      (B, H, W, C)
    gamma:  (4C,)   LayerNorm weight
    beta:   (4C,)   LayerNorm bias
    w_red:  (2C, 4C) nn.Linear weight (PyTorch out x in convention)
    returns (B, H//2, W//2, 2C)
    """
    B, H, W, C = x.shape
    Ho, Wo = H // 2, W // 2
    if (H % 2) or (W % 2):
        # TODO(synk): module also prints a warning for odd H/W; cropping here
        # is numerically identical to its SHAPE_FIX path.
        x = x[:, : 2 * Ho, : 2 * Wo, :]
    C2 = 2 * C                      # per-stream input width == output width
    Dout = 2 * C
    Dp = _round_up(Dout, 128)       # lane-dense output block (unmasked stores)
    N = B * Ho * Wo
    R = B * Ho

    # ---- fold the LayerNorm affine into the reduction weight (once, tiny) ----
    f32 = jnp.float32
    wt = w_red.T                                           # (4C, 2C): y @ wt
    wg = wt * gamma.astype(wt.dtype)[:, None]              # gamma folded into rows
    w_even = jnp.concatenate([wg[0:C], wg[2 * C:3 * C]], axis=0)     # pairs [x0|x2]
    w_odd = jnp.concatenate([wg[C:2 * C], wg[3 * C:4 * C]], axis=0)  # pairs [x1|x3]
    bias = (beta.astype(f32) @ wt.astype(f32)).reshape(1, Dout)      # beta @ W^T
    if Dp != Dout:
        w_even = jnp.pad(w_even, ((0, 0), (0, Dp - Dout)))
        w_odd = jnp.pad(w_odd, ((0, 0), (0, Dp - Dout)))
        bias = jnp.pad(bias, ((0, 0), (0, Dp - Dout)))

    # ---- tile size: ~target_tokens tokens per grid step, VMEM-bounded ----
    bytes_per_token = 4 * C * x.dtype.itemsize
    tok_budget = max(8, (2 << 20) // bytes_per_token)      # <=~2 MiB input block
    tgt = max(8, min(target_tokens, tok_budget))

    cost = pl.CostEstimate(
        flops=2 * N * 4 * C * Dp,
        transcendentals=N,
        bytes_accessed=(N * 4 * C * x.dtype.itemsize
                        + N * Dp * x.dtype.itemsize
                        + 2 * C2 * Dp * w_even.dtype.itemsize
                        + Dp * 4),
    )
    cparams = pltpu.CompilerParams(
        dimension_semantics=("parallel",),        # shards grid across TCs (v7x)
        vmem_limit_bytes=32 * 1024 * 1024,
    )
    w_specs = [
        pl.BlockSpec((C2, Dp), lambda i: (0, 0)),   # w_even (resident)
        pl.BlockSpec((C2, Dp), lambda i: (0, 0)),   # w_odd  (resident)
        pl.BlockSpec((1, Dp), lambda i: (0, 0)),    # bias   (resident)
    ]
    out_shape = jax.ShapeDtypeStruct((N, Dp), x.dtype)

    if Wo % 8 == 0:
        # Fused 2x2 gather: one block = TR output rows of the image
        # = TR*Wo tokens, read straight from the (freely reshaped) input.
        xr = x.reshape(R, 2, Wo, C2)
        tr = max(1, min(R, pl.cdiv(tgt, Wo)))
        tm = tr * Wo
        out2d = pl.pallas_call(
            _merge_kernel_fused,
            out_shape=out_shape,
            grid_spec=pltpu.PrefetchScalarGridSpec(
                num_scalar_prefetch=0,
                grid=(pl.cdiv(R, tr),),
                in_specs=[pl.BlockSpec((tr, 2, Wo, C2), lambda i: (i, 0, 0, 0))]
                + w_specs,
                out_specs=pl.BlockSpec((tm, Dp), lambda i: (i, 0)),
            ),
            compiler_params=cparams,
            cost_estimate=cost,
        )(xr, w_even, w_odd, bias)
    else:
        # Fallback when W/2 is not sublane-aligned: materialize the two
        # per-stream 2D views (one extra HBM pass), no 4C concat, no token pad.
        x0 = x[:, 0::2, 0::2, :]
        x1 = x[:, 1::2, 0::2, :]
        x2 = x[:, 0::2, 1::2, :]
        x3 = x[:, 1::2, 1::2, :]
        xe2d = jnp.concatenate([x0, x2], axis=-1).reshape(N, C2)
        xo2d = jnp.concatenate([x1, x3], axis=-1).reshape(N, C2)
        tm = N if N <= tgt else max(8, (tgt // 8) * 8)
        out2d = pl.pallas_call(
            _merge_kernel_2d,
            out_shape=out_shape,
            grid_spec=pltpu.PrefetchScalarGridSpec(
                num_scalar_prefetch=0,
                grid=(pl.cdiv(N, tm),),
                in_specs=[
                    pl.BlockSpec((tm, C2), lambda i: (i, 0)),
                    pl.BlockSpec((tm, C2), lambda i: (i, 0)),
                ]
                + w_specs,
                out_specs=pl.BlockSpec((tm, Dp), lambda i: (i, 0)),
            ),
            compiler_params=cparams,
            cost_estimate=cost,
        )(xe2d, xo2d, w_even, w_odd, bias)

    if Dp != Dout:
        out2d = out2d[:, :Dout]
    return out2d.reshape(B, Ho, Wo, Dout)


def _reference(x, gamma, beta, w_red):
    """Pure-JAX reference mirroring the PyTorch forward."""
    x0 = x[:, 0::2, 0::2, :]
    x1 = x[:, 1::2, 0::2, :]
    x2 = x[:, 0::2, 1::2, :]
    x3 = x[:, 1::2, 1::2, :]
    xc = jnp.concatenate([x0, x1, x2, x3], axis=-1).astype(jnp.float32)
    mean = jnp.mean(xc, axis=-1, keepdims=True)
    var = jnp.mean((xc - mean) ** 2, axis=-1, keepdims=True)
    xn = (xc - mean) / jnp.sqrt(var + EPS)
    y = xn * gamma + beta
    return jnp.einsum("bhwk,ok->bhwo", y, w_red.astype(jnp.float32))


if __name__ == "__main__":
    key = jax.random.PRNGKey(0)
    kx, kg, kb, kw = jax.random.split(key, 4)

    B, H, W, C = 2, 16, 16, 16          # small even resolution; dim = 16
    C4, C2 = 4 * C, 2 * C

    x = jax.random.normal(kx, (B, H, W, C), dtype=jnp.float32)
    gamma = 1.0 + 0.01 * jax.random.normal(kg, (C4,), dtype=jnp.float32)   # LN weight
    beta = 0.01 * jax.random.normal(kb, (C4,), dtype=jnp.float32)          # LN bias
    w_red = jax.random.normal(kw, (C2, C4), dtype=jnp.float32) / jnp.sqrt(C4)

    out = jax.block_until_ready(patch_merging_2d(x, gamma, beta, w_red))
    ref = _reference(x, gamma, beta, w_red)

    assert out.shape == (B, H // 2, W // 2, C2), out.shape
    max_err = float(jnp.max(jnp.abs(out - ref)))
    assert jnp.allclose(out, ref, atol=1e-4, rtol=1e-4), max_err
    print("KERNEL_OK")
</pallas_src>

<mosaic_0001>
module attributes {stable_mosaic.version = 11 : i64} {
  func.func @_merge_kernel_fused(%arg0: i32, %arg1: memref<16x2x8x32xf32, #tpu.memory_space<vmem>>, %arg2: memref<32x128xf32, #tpu.memory_space<vmem>>, %arg3: memref<32x128xf32, #tpu.memory_space<vmem>>, %arg4: memref<1x128xf32, #tpu.memory_space<vmem>>, %arg5: memref<128x128xf32, #tpu.memory_space<vmem>>) attributes {dimension_semantics = [#tpu.dimension_semantics<parallel>], iteration_bounds = array<i64: 1>, scalar_prefetch = 0 : i64, scratch_operands = 0 : i64, tpu.core_type = #tpu.core_type<tc>, window_params = [{transform_indices = @transform_0, window_bounds = array<i64: 16, 2, 8, 32>}, {pipeline_mode = #tpu.pipeline_mode<synchronous>, transform_indices = @transform_1, window_bounds = array<i64: 32, 128>}, {pipeline_mode = #tpu.pipeline_mode<synchronous>, transform_indices = @transform_2, window_bounds = array<i64: 32, 128>}, {pipeline_mode = #tpu.pipeline_mode<synchronous>, transform_indices = @transform_3, window_bounds = array<i64: 1, 128>}, {transform_indices = @transform_4, window_bounds = array<i64: 128, 128>}]} {
    %c0 = arith.constant 0 : index
    %c0_0 = arith.constant 0 : index
    %c0_1 = arith.constant 0 : index
    %c0_2 = arith.constant 0 : index
    %0 = vector.load %arg1[%c0, %c0_0, %c0_1, %c0_2] : memref<16x2x8x32xf32, #tpu.memory_space<vmem>>, vector<16x2x8x32xf32>
    %1 = vector.extract_strided_slice %0 {offsets = [0, 0, 0, 0], sizes = [16, 1, 8, 32], strides = [1, 1, 1, 1]} : vector<16x2x8x32xf32> to vector<16x1x8x32xf32>
    %2 = vector.shape_cast %1 : vector<16x1x8x32xf32> to vector<16x8x32xf32>
    %3 = vector.shape_cast %2 : vector<16x8x32xf32> to vector<128x32xf32>
    %4 = vector.extract_strided_slice %0 {offsets = [0, 1, 0, 0], sizes = [16, 1, 8, 32], strides = [1, 1, 1, 1]} : vector<16x2x8x32xf32> to vector<16x1x8x32xf32>
    %5 = vector.shape_cast %4 : vector<16x1x8x32xf32> to vector<16x8x32xf32>
    %6 = vector.shape_cast %5 : vector<16x8x32xf32> to vector<128x32xf32>
    %cst = arith.constant dense<0.000000e+00> : vector<128xf32>
    %7 = vector.multi_reduction <add>, %3, %cst [1] : vector<128x32xf32> to vector<128xf32>
    %8 = vector.shape_cast %7 : vector<128xf32> to vector<128x1xf32>
    %cst_3 = arith.constant dense<0.000000e+00> : vector<128xf32>
    %9 = vector.multi_reduction <add>, %6, %cst_3 [1] : vector<128x32xf32> to vector<128xf32>
    %10 = vector.shape_cast %9 : vector<128xf32> to vector<128x1xf32>
    %11 = arith.addf %8, %10 : vector<128x1xf32>
    %12 = arith.mulf %3, %3 : vector<128x32xf32>
    %cst_4 = arith.constant dense<0.000000e+00> : vector<128xf32>
    %13 = vector.multi_reduction <add>, %12, %cst_4 [1] : vector<128x32xf32> to vector<128xf32>
    %14 = vector.shape_cast %13 : vector<128xf32> to vector<128x1xf32>
    %15 = arith.mulf %6, %6 : vector<128x32xf32>
    %cst_5 = arith.constant dense<0.000000e+00> : vector<128xf32>
    %16 = vector.multi_reduction <add>, %15, %cst_5 [1] : vector<128x32xf32> to vector<128xf32>
    %17 = vector.shape_cast %16 : vector<128xf32> to vector<128x1xf32>
    %18 = arith.addf %14, %17 : vector<128x1xf32>
    %cst_6 = arith.constant 1.562500e-02 : f32
    %19 = vector.broadcast %cst_6 : f32 to vector<128x1xf32>
    %20 = arith.mulf %11, %19 : vector<128x1xf32>
    %cst_7 = arith.constant 1.562500e-02 : f32
    %21 = vector.broadcast %cst_7 : f32 to vector<128x1xf32>
    %22 = arith.mulf %18, %21 : vector<128x1xf32>
    %23 = arith.mulf %20, %20 : vector<128x1xf32>
    %24 = arith.subf %22, %23 : vector<128x1xf32>
    %cst_8 = arith.constant 9.99999974E-6 : f32
    %25 = vector.broadcast %cst_8 : f32 to vector<128x1xf32>
    %26 = arith.addf %24, %25 : vector<128x1xf32>
    %27 = math.rsqrt %26 : vector<128x1xf32>
    %28 = vector.broadcast %20 : vector<128x1xf32> to vector<128x32xf32>
    %29 = arith.subf %3, %28 : vector<128x32xf32>
    %30 = vector.broadcast %27 : vector<128x1xf32> to vector<128x32xf32>
    %31 = arith.mulf %29, %30 : vector<128x32xf32>
    %32 = vector.broadcast %20 : vector<128x1xf32> to vector<128x32xf32>
    %33 = arith.subf %6, %32 : vector<128x32xf32>
    %34 = vector.broadcast %27 : vector<128x1xf32> to vector<128x32xf32>
    %35 = arith.mulf %33, %34 : vector<128x32xf32>
    %c0_9 = arith.constant 0 : index
    %c0_10 = arith.constant 0 : index
    %36 = vector.load %arg2[%c0_9, %c0_10] : memref<32x128xf32, #tpu.memory_space<vmem>>, vector<32x128xf32>
    %cst_11 = arith.constant dense<0.000000e+00> : vector<128x128xf32>
    %37 = tpu.matmul %31, %36, %cst_11 {dimension_numbers = #tpu.dot_dimension_numbers<[1], [0], [0], [1], [0, 0, 1, 1], [], []>} : vector<128x32xf32>, vector<32x128xf32>, vector<128x128xf32> -> vector<128x128xf32>
    %c0_12 = arith.constant 0 : index
    %c0_13 = arith.constant 0 : index
    %38 = vector.load %arg3[%c0_12, %c0_13] : memref<32x128xf32, #tpu.memory_space<vmem>>, vector<32x128xf32>
    %cst_14 = arith.constant dense<0.000000e+00> : vector<128x128xf32>
    %39 = tpu.matmul %35, %38, %cst_14 {dimension_numbers = #tpu.dot_dimension_numbers<[1], [0], [0], [1], [0, 0, 1, 1], [], []>} : vector<128x32xf32>, vector<32x128xf32>, vector<128x128xf32> -> vector<128x128xf32>
    %40 = arith.addf %37, %39 : vector<128x128xf32>
    %c0_15 = arith.constant 0 : index
    %c0_16 = arith.constant 0 : index
    %41 = vector.load %arg4[%c0_15, %c0_16] : memref<1x128xf32, #tpu.memory_space<vmem>>, vector<1x128xf32>
    %42 = vector.broadcast %41 : vector<1x128xf32> to vector<128x128xf32>
    %43 = arith.addf %40, %42 : vector<128x128xf32>
    %c0_17 = arith.constant 0 : index
    %c0_18 = arith.constant 0 : index
    %44 = vector.load %arg5[%c0_17, %c0_18] : memref<128x128xf32, #tpu.memory_space<vmem>>, vector<128x128xf32>
    tpu.vector_store %arg5[%c0_17, %c0_18], %43 {strides = array<i32>} : memref<128x128xf32, #tpu.memory_space<vmem>>, vector<128x128xf32>,
    return
  }
  func.func @transform_0(%arg0: i32) -> (i32, i32, i32, i32) {
    %c0_i32 = arith.constant 0 : i32
    %c0_i32_0 = arith.constant 0 : i32
    %c0_i32_1 = arith.constant 0 : i32
    %c0_i32_2 = arith.constant 0 : i32
    return %arg0, %c0_i32, %c0_i32_0, %c0_i32_1 : i32, i32, i32, i32
  }
  func.func @transform_1(%arg0: i32) -> (i32, i32) {
    %c0_i32 = arith.constant 0 : i32
    %c0_i32_0 = arith.constant 0 : i32
    %c0_i32_1 = arith.constant 0 : i32
    return %c0_i32, %c0_i32_0 : i32, i32
  }
  func.func @transform_2(%arg0: i32) -> (i32, i32) {
    %c0_i32 = arith.constant 0 : i32
    %c0_i32_0 = arith.constant 0 : i32
    %c0_i32_1 = arith.constant 0 : i32
    return %c0_i32, %c0_i32_0 : i32, i32
  }
  func.func @transform_3(%arg0: i32) -> (i32, i32) {
    %c0_i32 = arith.constant 0 : i32
    %c0_i32_0 = arith.constant 0 : i32
    %c0_i32_1 = arith.constant 0 : i32
    return %c0_i32, %c0_i32_0 : i32, i32
  }
  func.func @transform_4(%arg0: i32) -> (i32, i32) {
    %c0_i32 = arith.constant 0 : i32
    %c0_i32_0 = arith.constant 0 : i32
    return %arg0, %c0_i32 : i32, i32
  }
}

</mosaic_0001>

<llo_original>
// kernel: tpu_custom_call.1
$region0: #{tpu_custom_call.1}
  #allocation0 [shape = 'u32[]', space=smem, size = 0x4, offset = 0x4, fixed_abs, tag = 'smem constant byte address 0x4 - core index']
  #allocation1 [shape = 'u32[144,128]{1,0:T(1,128)}', space=vmem, size = 0x12000, scoped, tag = 'internal scratch']
  %s0 = inlined_call_operand.hbm [shape: f32[16,2,8,32], index: 0, kind: input, shape index: {}]
  %s1 = inlined_call_operand.hbm [shape: f32[32,128], index: 1, kind: input, shape index: {}]
  %s2 = inlined_call_operand.hbm [shape: f32[32,128], index: 2, kind: input, shape index: {}]
  %s3 = inlined_call_operand.vmem [shape: f32[1,128], index: 3, kind: input, shape index: {}]
  %s4 = inlined_call_operand.hbm [shape: f32[128,128], index: 4, kind: output, shape index: {}]
  %s5 = sld [smem:[#allocation0]]
  $region38: #{tpu_custom_call.1} parent=0
    _
  %s7 = ssub.s32 1, %s5
  %s8 = scalar_select 0, %s7, %s5
  $region1: #{tpu_custom_call.1} parent=0
    #allocation2 [shape = 'u8[131072]{0}', space=vmem, size = 0x20000, scoped, tag = 'input window, operand 0, single buffered']
    #allocation3 [shape = 's32[1]{0}', space=sflag, size = 0x4, scoped, tag = 'scoped memory for tpu_custom_call.1']
    #allocation4 [shape = 's32[1]{0}', space=sflag, size = 0x4, scoped, tag = 'scoped memory for tpu_custom_call.1']
    #allocation5 [shape = 'u8[16384]{0}', space=vmem, size = 0x4000, scoped, tag = 'input window, operand 1, single buffered']
    #allocation6 [shape = 's32[1]{0}', space=sflag, size = 0x4, scoped, tag = 'scoped memory for tpu_custom_call.1']
    #allocation7 [shape = 'u8[16384]{0}', space=vmem, size = 0x4000, scoped, tag = 'input window, operand 2, single buffered']
    #allocation8 [shape = 'u8[65536]{0}', space=vmem, size = 0x10000, scoped, tag = 'output window, operand 0, single buffered']
    %9 = vsyncpa [#allocation3], 0
    %10 = vsyncpa [#allocation6], 0
    %11 = vsyncpa [#allocation4], 0
    // Predicated region
    $region2: #{tpu_custom_call.1} parent=1 // pred_check
      _
    $region3: #{tpu_custom_call.1} parent=1 // pred_check_branch
      %13 = sbr.rel (0) target = $region5
    $region4: #{tpu_custom_call.1} parent=1 // pred_region
      %s15 = ssub.s32 4096, 4096
      %16 = vsyncadd [#allocation3], %s15
      %s17 = sshll.u32 [#allocation2], 4
      %s18 = int_to_ptr.vmem [resolvable:$true] %s17
      %23 = dma.hbm_to_vmem [thread:$0]  %s0, 4096, %s18, [#allocation3], 128, 128, 8
    $region5: #{tpu_custom_call.1} parent=1 // pred_fallthru
      _
    // Predicated region
    $region6: #{tpu_custom_call.1} parent=1 // pred_check
      _
    $region7: #{tpu_custom_call.1} parent=1 // pred_check_branch
      %25 = sbr.rel (0) target = $region9
    $region8: #{tpu_custom_call.1} parent=1 // pred_region
      %s27 = ssub.s32 512, 512
      %28 = vsyncadd [#allocation6], %s27
      %s29 = sshll.u32 [#allocation5], 4
      %s30 = int_to_ptr.vmem [resolvable:$true] %s29
      %35 = dma.hbm_to_vmem [thread:$0]  %s1, 512, %s30, [#allocation6], 128, 128, 8
    $region9: #{tpu_custom_call.1} parent=1 // pred_fallthru
      _
    // Predicated region
    $region10: #{tpu_custom_call.1} parent=1 // pred_check
      _
    $region11: #{tpu_custom_call.1} parent=1 // pred_check_branch
      %37 = sbr.rel (0) target = $region13
    $region12: #{tpu_custom_call.1} parent=1 // pred_region
      %s39 = ssub.s32 512, 512
      %40 = vsyncadd [#allocation6], %s39
      %s41 = sshll.u32 [#allocation7], 4
      %s42 = int_to_ptr.vmem [resolvable:$true] %s41
      %47 = dma.hbm_to_vmem [thread:$0]  %s2, 512, %s42, [#allocation6], 128, 128, 8
    $region13: #{tpu_custom_call.1} parent=1 // pred_fallthru
      _
    // Predicated region
    $region14: #{tpu_custom_call.1} parent=1 // pred_check
      _
    $region15: #{tpu_custom_call.1} parent=1 // pred_check_branch
      %49 = sbr.rel (0) target = $region17
    $region16: #{tpu_custom_call.1} parent=1 // pred_region
      _
    $region17: #{tpu_custom_call.1} parent=1 // pred_fallthru
      _
    // Predicated region
    $region18: #{tpu_custom_call.1} parent=1 // pred_check
      _
    $region19: #{tpu_custom_call.1} parent=1 // pred_check_branch
      %51 = sbr.rel (0) target = $region21
    $region20: #{tpu_custom_call.1} parent=1 // pred_region
      %52 = dma.done [#allocation3], 4096
    $region21: #{tpu_custom_call.1} parent=1 // pred_fallthru
      _
    // Predicated region
    $region22: #{tpu_custom_call.1} parent=1 // pred_check
      _
    $region23: #{tpu_custom_call.1} parent=1 // pred_check_branch
      %54 = sbr.rel (0) target = $region25
    $region24: #{tpu_custom_call.1} parent=1 // pred_region
      %55 = dma.done [#allocation6], 512
    $region25: #{tpu_custom_call.1} parent=1 // pred_fallthru
      _
    // Predicated region
    $region26: #{tpu_custom_call.1} parent=1 // pred_check
      _
    $region27: #{tpu_custom_call.1} parent=1 // pred_check_branch
      %57 = sbr.rel (0) target = $region29
    $region28: #{tpu_custom_call.1} parent=1 // pred_region
      %58 = dma.done [#allocation6], 512
    $region29: #{tpu_custom_call.1} parent=1 // pred_fallthru
      _
    %v59 = vld [vmem:[#allocation2] sm:$0xff]
    %v60 = vld [vmem:[#allocation2 + $0x8] sm:$0xff]
    %v61 = vld [vmem:[#allocation2 + $0x10] sm:$0xff]
    %v62 = vld [vmem:[#allocation2 + $0x18] sm:$0xff]
    %v63 = vld [vmem:[#allocation2 + $0x20] sm:$0xff]
    %v64 = vld [vmem:[#allocation2 + $0x28] sm:$0xff]
    %v65 = vld [vmem:[#allocation2 + $0x30] sm:$0xff]
    %v66 = vld [vmem:[#allocation2 + $0x38] sm:$0xff]
    %v67 = vld [vmem:[#allocation2 + $0x40] sm:$0xff]
    %v68 = vld [vmem:[#allocation2 + $0x48] sm:$0xff]
    %v69 = vld [vmem:[#allocation2 + $0x50] sm:$0xff]
    %v70 = vld [vmem:[#allocation2 + $0x58] sm:$0xff]
    %v71 = vld [vmem:[#allocation2 + $0x60] sm:$0xff]
    %v72 = vld [vmem:[#allocation2 + $0x68] sm:$0xff]
    %v73 = vld [vmem:[#allocation2 + $0x70] sm:$0xff]
    %v74 = vld [vmem:[#allocation2 + $0x78] sm:$0xff]
    %v75 = vld [vmem:[#allocation2 + $0x80] sm:$0xff]
    %v76 = vld [vmem:[#allocation2 + $0x88] sm:$0xff]
    %v77 = vld [vmem:[#allocation2 + $0x90] sm:$0xff]
    %v78 = vld [vmem:[#allocation2 + $0x98] sm:$0xff]
    %v79 = vld [vmem:[#allocation2 + $0xa0] sm:$0xff]
    %v80 = vld [vmem:[#allocation2 + $0xa8] sm:$0xff]
    %v81 = vld [vmem:[#allocation2 + $0xb0] sm:$0xff]
    %v82 = vld [vmem:[#allocation2 + $0xb8] sm:$0xff]
    %v83 = vld [vmem:[#allocation2 + $0xc0] sm:$0xff]
    %v84 = vld [vmem:[#allocation2 + $0xc8] sm:$0xff]
    %v85 = vld [vmem:[#allocation2 + $0xd0] sm:$0xff]
    %v86 = vld [vmem:[#allocation2 + $0xd8] sm:$0xff]
    %v87 = vld [vmem:[#allocation2 + $0xe0] sm:$0xff]
    %v88 = vld [vmem:[#allocation2 + $0xe8] sm:$0xff]
    %v89 = vld [vmem:[#allocation2 + $0xf0] sm:$0xff]
    %v90 = vld [vmem:[#allocation2 + $0xf8] sm:$0xff]
    %vm91 = vcmask 261120
    %v92 = vsel %vm91, %v59, 0.0
    %93 = vadd.xlane.f32.xlu0 %v92
    %v94 = vpop.xlane.xlu0 %93
    %v95 = vsel %vm91, %v61, 0.0
    %96 = vadd.xlane.f32.xlu0 %v95
    %v97 = vpop.xlane.xlu0 %96
    %v98 = vsel %vm91, %v63, 0.0
    %99 = vadd.xlane.f32.xlu0 %v98
    %v100 = vpop.xlane.xlu0 %99
    %v101 = vsel %vm91, %v65, 0.0
    %102 = vadd.xlane.f32.xlu0 %v101
    %v103 = vpop.xlane.xlu0 %102
    %v104 = vsel %vm91, %v67, 0.0
    %105 = vadd.xlane.f32.xlu0 %v104
    %v106 = vpop.xlane.xlu0 %105
    %v107 = vsel %vm91, %v69, 0.0
    %108 = vadd.xlane.f32.xlu0 %v107
    %v109 = vpop.xlane.xlu0 %108
    %v110 = vsel %vm91, %v71, 0.0
    %111 = vadd.xlane.f32.xlu0 %v110
    %v112 = vpop.xlane.xlu0 %111
    %v113 = vsel %vm91, %v73, 0.0
    %114 = vadd.xlane.f32.xlu0 %v113
    %v115 = vpop.xlane.xlu0 %114
    %v116 = vsel %vm91, %v75, 0.0
    %117 = vadd.xlane.f32.xlu0 %v116
    %v118 = vpop.xlane.xlu0 %117
    %v119 = vsel %vm91, %v77, 0.0
    %120 = vadd.xlane.f32.xlu0 %v119
    %v121 = vpop.xlane.xlu0 %120
    %v122 = vsel %vm91, %v79, 0.0
    %123 = vadd.xlane.f32.xlu0 %v122
    %v124 = vpop.xlane.xlu0 %123
    %v125 = vsel %vm91, %v81, 0.0
    %126 = vadd.xlane.f32.xlu0 %v125
    %v127 = vpop.xlane.xlu0 %126
    %v128 = vsel %vm91, %v83, 0.0
    %129 = vadd.xlane.f32.xlu0 %v128
    %v130 = vpop.xlane.xlu0 %129
    %v131 = vsel %vm91, %v85, 0.0
    %132 = vadd.xlane.f32.xlu0 %v131
    %v133 = vpop.xlane.xlu0 %132
    %v134 = vsel %vm91, %v87, 0.0
    %135 = vadd.xlane.f32.xlu0 %v134
    %v136 = vpop.xlane.xlu0 %135
    %v137 = vsel %vm91, %v89, 0.0
    %138 = vadd.xlane.f32.xlu0 %v137
    %v139 = vpop.xlane.xlu0 %138
    %v140 = vsel %vm91, %v60, 0.0
    %141 = vadd.xlane.f32.xlu0 %v140
    %v142 = vpop.xlane.xlu0 %141
    %v143 = vsel %vm91, %v62, 0.0
    %144 = vadd.xlane.f32.xlu0 %v143
    %v145 = vpop.xlane.xlu0 %144
    %v146 = vsel %vm91, %v64, 0.0
    %147 = vadd.xlane.f32.xlu0 %v146
    %v148 = vpop.xlane.xlu0 %147
    %v149 = vsel %vm91, %v66, 0.0
    %150 = vadd.xlane.f32.xlu0 %v149
    %v151 = vpop.xlane.xlu0 %150
    %v152 = vsel %vm91, %v68, 0.0
    %153 = vadd.xlane.f32.xlu0 %v152
    %v154 = vpop.xlane.xlu0 %153
    %v155 = vsel %vm91, %v70, 0.0
    %156 = vadd.xlane.f32.xlu0 %v155
    %v157 = vpop.xlane.xlu0 %156
    %v158 = vsel %vm91, %v72, 0.0
    %159 = vadd.xlane.f32.xlu0 %v158
    %v160 = vpop.xlane.xlu0 %159
    %v161 = vsel %vm91, %v74, 0.0
    %162 = vadd.xlane.f32.xlu0 %v161
    %v163 = vpop.xlane.xlu0 %162
    %v164 = vsel %vm91, %v76, 0.0
    %165 = vadd.xlane.f32.xlu0 %v164
    %v166 = vpop.xlane.xlu0 %165
    %v167 = vsel %vm91, %v78, 0.0
    %168 = vadd.xlane.f32.xlu0 %v167
    %v169 = vpop.xlane.xlu0 %168
    %v170 = vsel %vm91, %v80, 0.0
    %171 = vadd.xlane.f32.xlu0 %v170
    %v172 = vpop.xlane.xlu0 %171
    %v173 = vsel %vm91, %v82, 0.0
    %174 = vadd.xlane.f32.xlu0 %v173
    %v175 = vpop.xlane.xlu0 %174
    %v176 = vsel %vm91, %v84, 0.0
    %177 = vadd.xlane.f32.xlu0 %v176
    %v178 = vpop.xlane.xlu0 %177
    %v179 = vsel %vm91, %v86, 0.0
    %180 = vadd.xlane.f32.xlu0 %v179
    %v181 = vpop.xlane.xlu0 %180
    %v182 = vsel %vm91, %v88, 0.0
    %183 = vadd.xlane.f32.xlu0 %v182
    %v184 = vpop.xlane.xlu0 %183
    %v185 = vsel %vm91, %v90, 0.0
    %186 = vadd.xlane.f32.xlu0 %v185
    %v187 = vpop.xlane.xlu0 %186
    %v188 = vadd.f32 %v94, %v142
    %v189 = vadd.f32 %v97, %v145
    %v190 = vadd.f32 %v100, %v148
    %v191 = vadd.f32 %v103, %v151
    %v192 = vadd.f32 %v106, %v154
    %v193 = vadd.f32 %v109, %v157
    %v194 = vadd.f32 %v112, %v160
    %v195 = vadd.f32 %v115, %v163
    %v196 = vadd.f32 %v118, %v166
    %v197 = vadd.f32 %v121, %v169
    %v198 = vadd.f32 %v124, %v172
    %v199 = vadd.f32 %v127, %v175
    %v200 = vadd.f32 %v130, %v178
    %v201 = vadd.f32 %v133, %v181
    %v202 = vadd.f32 %v136, %v184
    %v203 = vadd.f32 %v139, %v187
    %v204 = vmul.f32 %v59, %v59
    %v205 = vmul.f32 %v61, %v61
    %v206 = vmul.f32 %v63, %v63
    %v207 = vmul.f32 %v65, %v65
    %v208 = vmul.f32 %v67, %v67
    %v209 = vmul.f32 %v69, %v69
    %v210 = vmul.f32 %v71, %v71
    %v211 = vmul.f32 %v73, %v73
    %v212 = vmul.f32 %v75, %v75
    %v213 = vmul.f32 %v77, %v77
    %v214 = vmul.f32 %v79, %v79
    %v215 = vmul.f32 %v81, %v81
    %v216 = vmul.f32 %v83, %v83
    %v217 = vmul.f32 %v85, %v85
    %v218 = vmul.f32 %v87, %v87
    %v219 = vmul.f32 %v89, %v89
    %v220 = vsel %vm91, %v204, 0.0
    %221 = vadd.xlane.f32.xlu0 %v220
    %v222 = vpop.xlane.xlu0 %221
    %v223 = vsel %vm91, %v205, 0.0
    %224 = vadd.xlane.f32.xlu0 %v223
    %v225 = vpop.xlane.xlu0 %224
    %v226 = vsel %vm91, %v206, 0.0
    %227 = vadd.xlane.f32.xlu0 %v226
    %v228 = vpop.xlane.xlu0 %227
    %v229 = vsel %vm91, %v207, 0.0
    %230 = vadd.xlane.f32.xlu0 %v229
    %v231 = vpop.xlane.xlu0 %230
    %v232 = vsel %vm91, %v208, 0.0
    %233 = vadd.xlane.f32.xlu0 %v232
    %v234 = vpop.xlane.xlu0 %233
    %v235 = vsel %vm91, %v209, 0.0
    %236 = vadd.xlane.f32.xlu0 %v235
    %v237 = vpop.xlane.xlu0 %236
    %v238 = vsel %vm91, %v210, 0.0
    %239 = vadd.xlane.f32.xlu0 %v238
    %v240 = vpop.xlane.xlu0 %239
    %v241 = vsel %vm91, %v211, 0.0
    %242 = vadd.xlane.f32.xlu0 %v241
    %v243 = vpop.xlane.xlu0 %242
    %v244 = vsel %vm91, %v212, 0.0
    %245 = vadd.xlane.f32.xlu0 %v244
    %v246 = vpop.xlane.xlu0 %245
    %v247 = vsel %vm91, %v213, 0.0
    %248 = vadd.xlane.f32.xlu0 %v247
    %v249 = vpop.xlane.xlu0 %248
    %v250 = vsel %vm91, %v214, 0.0
    %251 = vadd.xlane.f32.xlu0 %v250
    %v252 = vpop.xlane.xlu0 %251
    %v253 = vsel %vm91, %v215, 0.0
    %254 = vadd.xlane.f32.xlu0 %v253
    %v255 = vpop.xlane.xlu0 %254
    %v256 = vsel %vm91, %v216, 0.0
    %257 = vadd.xlane.f32.xlu0 %v256
    %v258 = vpop.xlane.xlu0 %257
    %v259 = vsel %vm91, %v217, 0.0
    %260 = vadd.xlane.f32.xlu0 %v259
    %v261 = vpop.xlane.xlu0 %260
    %v262 = vsel %vm91, %v218, 0.0
    %263 = vadd.xlane.f32.xlu0 %v262
    %v264 = vpop.xlane.xlu0 %263
    %v265 = vsel %vm91, %v219, 0.0
    %266 = vadd.xlane.f32.xlu0 %v265
    %v267 = vpop.xlane.xlu0 %266
    %v268 = vmul.f32 %v60, %v60
    %v269 = vmul.f32 %v62, %v62
    %v270 = vmul.f32 %v64, %v64
    %v271 = vmul.f32 %v66, %v66
    %v272 = vmul.f32 %v68, %v68
    %v273 = vmul.f32 %v70, %v70
    %v274 = vmul.f32 %v72, %v72
    %v275 = vmul.f32 %v74, %v74
    %v276 = vmul.f32 %v76, %v76
    %v277 = vmul.f32 %v78, %v78
    %v278 = vmul.f32 %v80, %v80
    %v279 = vmul.f32 %v82, %v82
    %v280 = vmul.f32 %v84, %v84
    %v281 = vmul.f32 %v86, %v86
    %v282 = vmul.f32 %v88, %v88
    %v283 = vmul.f32 %v90, %v90
    %v284 = vsel %vm91, %v268, 0.0
    %285 = vadd.xlane.f32.xlu0 %v284
    %v286 = vpop.xlane.xlu0 %285
    %v287 = vsel %vm91, %v269, 0.0
    %288 = vadd.xlane.f32.xlu0 %v287
    %v289 = vpop.xlane.xlu0 %288
    %v290 = vsel %vm91, %v270, 0.0
    %291 = vadd.xlane.f32.xlu0 %v290
    %v292 = vpop.xlane.xlu0 %291
    %v293 = vsel %vm91, %v271, 0.0
    %294 = vadd.xlane.f32.xlu0 %v293
    %v295 = vpop.xlane.xlu0 %294
    %v296 = vsel %vm91, %v272, 0.0
    %297 = vadd.xlane.f32.xlu0 %v296
    %v298 = vpop.xlane.xlu0 %297
    %v299 = vsel %vm91, %v273, 0.0
    %300 = vadd.xlane.f32.xlu0 %v299
    %v301 = vpop.xlane.xlu0 %300
    %v302 = vsel %vm91, %v274, 0.0
    %303 = vadd.xlane.f32.xlu0 %v302
    %v304 = vpop.xlane.xlu0 %303
    %v305 = vsel %vm91, %v275, 0.0
    %306 = vadd.xlane.f32.xlu0 %v305
    %v307 = vpop.xlane.xlu0 %306
    %v308 = vsel %vm91, %v276, 0.0
    %309 = vadd.xlane.f32.xlu0 %v308
    %v310 = vpop.xlane.xlu0 %309
    %v311 = vsel %vm91, %v277, 0.0
    %312 = vadd.xlane.f32.xlu0 %v311
    %v313 = vpop.xlane.xlu0 %312
    %v314 = vsel %vm91, %v278, 0.0
    %315 = vadd.xlane.f32.xlu0 %v314
    %v316 = vpop.xlane.xlu0 %315
    %v317 = vsel %vm91, %v279, 0.0
    %318 = vadd.xlane.f32.xlu0 %v317
    %v319 = vpop.xlane.xlu0 %318
    %v320 = vsel %vm91, %v280, 0.0
    %321 = vadd.xlane.f32.xlu0 %v320
    %v322 = vpop.xlane.xlu0 %321
    %v323 = vsel %vm91, %v281, 0.0
    %324 = vadd.xlane.f32.xlu0 %v323
    %v325 = vpop.xlane.xlu0 %324
    %v326 = vsel %vm91, %v282, 0.0
    %327 = vadd.xlane.f32.xlu0 %v326
    %v328 = vpop.xlane.xlu0 %327
    %v329 = vsel %vm91, %v283, 0.0
    %330 = vadd.xlane.f32.xlu0 %v329
    %v331 = vpop.xlane.xlu0 %330
    %v332 = vadd.f32 %v222, %v286
    %v333 = vadd.f32 %v225, %v289
    %v334 = vadd.f32 %v228, %v292
    %v335 = vadd.f32 %v231, %v295
    %v336 = vadd.f32 %v234, %v298
    %v337 = vadd.f32 %v237, %v301
    %v338 = vadd.f32 %v240, %v304
    %v339 = vadd.f32 %v243, %v307
    %v340 = vadd.f32 %v246, %v310
    %v341 = vadd.f32 %v249, %v313
    %v342 = vadd.f32 %v252, %v316
    %v343 = vadd.f32 %v255, %v319
    %v344 = vadd.f32 %v258, %v322
    %v345 = vadd.f32 %v261, %v325
    %v346 = vadd.f32 %v264, %v328
    %v347 = vadd.f32 %v267, %v331
    %v348 = vmul.f32 %v188, 0.015625
    %v349 = vmul.f32 %v189, 0.015625
    %v350 = vmul.f32 %v190, 0.015625
    %v351 = vmul.f32 %v191, 0.015625
    %v352 = vmul.f32 %v192, 0.015625
    %v353 = vmul.f32 %v193, 0.015625
    %v354 = vmul.f32 %v194, 0.015625
    %v355 = vmul.f32 %v195, 0.015625
    %v356 = vmul.f32 %v196, 0.015625
    %v357 = vmul.f32 %v197, 0.015625
    %v358 = vmul.f32 %v198, 0.015625
    %v359 = vmul.f32 %v199, 0.015625
    %v360 = vmul.f32 %v200, 0.015625
    %v361 = vmul.f32 %v201, 0.015625
    %v362 = vmul.f32 %v202, 0.015625
    %v363 = vmul.f32 %v203, 0.015625
    %v364 = vmul.f32 %v332, 0.015625
    %v365 = vmul.f32 %v333, 0.015625
    %v366 = vmul.f32 %v334, 0.015625
    %v367 = vmul.f32 %v335, 0.015625
    %v368 = vmul.f32 %v336, 0.015625
    %v369 = vmul.f32 %v337, 0.015625
    %v370 = vmul.f32 %v338, 0.015625
    %v371 = vmul.f32 %v339, 0.015625
    %v372 = vmul.f32 %v340, 0.015625
    %v373 = vmul.f32 %v341, 0.015625
    %v374 = vmul.f32 %v342, 0.015625
    %v375 = vmul.f32 %v343, 0.015625
    %v376 = vmul.f32 %v344, 0.015625
    %v377 = vmul.f32 %v345, 0.015625
    %v378 = vmul.f32 %v346, 0.015625
    %v379 = vmul.f32 %v347, 0.015625
    %v380 = vmul.f32 %v348, %v348
    %v381 = vmul.f32 %v349, %v349
    %v382 = vmul.f32 %v350, %v350
    %v383 = vmul.f32 %v351, %v351
    %v384 = vmul.f32 %v352, %v352
    %v385 = vmul.f32 %v353, %v353
    %v386 = vmul.f32 %v354, %v354
    %v387 = vmul.f32 %v355, %v355
    %v388 = vmul.f32 %v356, %v356
    %v389 = vmul.f32 %v357, %v357
    %v390 = vmul.f32 %v358, %v358
    %v391 = vmul.f32 %v359, %v359
    %v392 = vmul.f32 %v360, %v360
    %v393 = vmul.f32 %v361, %v361
    %v394 = vmul.f32 %v362, %v362
    %v395 = vmul.f32 %v363, %v363
    %v396 = vsub.f32 %v364, %v380
    %v397 = vsub.f32 %v365, %v381
    %v398 = vsub.f32 %v366, %v382
    %v399 = vsub.f32 %v367, %v383
    %v400 = vsub.f32 %v368, %v384
    %v401 = vsub.f32 %v369, %v385
    %v402 = vsub.f32 %v370, %v386
    %v403 = vsub.f32 %v371, %v387
    %v404 = vsub.f32 %v372, %v388
    %v405 = vsub.f32 %v373, %v389
    %v406 = vsub.f32 %v374, %v390
    %v407 = vsub.f32 %v375, %v391
    %v408 = vsub.f32 %v376, %v392
    %v409 = vsub.f32 %v377, %v393
    %v410 = vsub.f32 %v378, %v394
    %v411 = vsub.f32 %v379, %v395
    %v412 = vadd.f32 %v396, 1e-05
    %v413 = vadd.f32 %v397, 1e-05
    %v414 = vadd.f32 %v398, 1e-05
    %v415 = vadd.f32 %v399, 1e-05
    %v416 = vadd.f32 %v400, 1e-05
    %v417 = vadd.f32 %v401, 1e-05
    %v418 = vadd.f32 %v402, 1e-05
    %v419 = vadd.f32 %v403, 1e-05
    %v420 = vadd.f32 %v404, 1e-05
    %v421 = vadd.f32 %v405, 1e-05
    %v422 = vadd.f32 %v406, 1e-05
    %v423 = vadd.f32 %v407, 1e-05
    %v424 = vadd.f32 %v408, 1e-05
    %v425 = vadd.f32 %v409, 1e-05
    %v426 = vadd.f32 %v410, 1e-05
    %v427 = vadd.f32 %v411, 1e-05
    %v428 = vrsqrt.pop %v412
    %v429 = vrsqrt.pop %v413
    %v430 = vrsqrt.pop %v414
    %v431 = vrsqrt.pop %v415
    %v432 = vrsqrt.pop %v416
    %v433 = vrsqrt.pop %v417
    %v434 = vrsqrt.pop %v418
    %v435 = vrsqrt.pop %v419
    %v436 = vrsqrt.pop %v420
    %v437 = vrsqrt.pop %v421
    %v438 = vrsqrt.pop %v422
    %v439 = vrsqrt.pop %v423
    %v440 = vrsqrt.pop %v424
    %v441 = vrsqrt.pop %v425
    %v442 = vrsqrt.pop %v426
    %v443 = vrsqrt.pop %v427
    %v444 = vsub.f32 %v59, %v348
    %v445 = vsub.f32 %v61, %v349
    %v446 = vsub.f32 %v63, %v350
    %v447 = vsub.f32 %v65, %v351
    %v448 = vsub.f32 %v67, %v352
    %v449 = vsub.f32 %v69, %v353
    %v450 = vsub.f32 %v71, %v354
    %v451 = vsub.f32 %v73, %v355
    %v452 = vsub.f32 %v75, %v356
    %v453 = vsub.f32 %v77, %v357
    %v454 = vsub.f32 %v79, %v358
    %v455 = vsub.f32 %v81, %v359
    %v456 = vsub.f32 %v83, %v360
    %v457 = vsub.f32 %v85, %v361
    %v458 = vsub.f32 %v87, %v362
    %v459 = vsub.f32 %v89, %v363
    %v460 = vmul.f32 %v444, %v428
    %v461 = vmul.f32 %v445, %v429
    %v462 = vmul.f32 %v446, %v430
    %v463 = vmul.f32 %v447, %v431
    %v464 = vmul.f32 %v448, %v432
    %v465 = vmul.f32 %v449, %v433
    %v466 = vmul.f32 %v450, %v434
    %v467 = vmul.f32 %v451, %v435
    %v468 = vmul.f32 %v452, %v436
    %v469 = vmul.f32 %v453, %v437
    %v470 = vmul.f32 %v454, %v438
    %v471 = vmul.f32 %v455, %v439
    %v472 = vmul.f32 %v456, %v440
    %v473 = vmul.f32 %v457, %v441
    %v474 = vmul.f32 %v458, %v442
    %v475 = vmul.f32 %v459, %v443
    %v476 = vsub.f32 %v60, %v348
    %v477 = vsub.f32 %v62, %v349
    %v478 = vsub.f32 %v64, %v350
    %v479 = vsub.f32 %v66, %v351
    %v480 = vsub.f32 %v68, %v352
    %v481 = vsub.f32 %v70, %v353
    %v482 = vsub.f32 %v72, %v354
    %v483 = vsub.f32 %v74, %v355
    %v484 = vsub.f32 %v76, %v356
    %v485 = vsub.f32 %v78, %v357
    %v486 = vsub.f32 %v80, %v358
    %v487 = vsub.f32 %v82, %v359
    %v488 = vsub.f32 %v84, %v360
    %v489 = vsub.f32 %v86, %v361
    %v490 = vsub.f32 %v88, %v362
    %v491 = vsub.f32 %v90, %v363
    %v492 = vmul.f32 %v476, %v428
    %v493 = vmul.f32 %v477, %v429
    %v494 = vmul.f32 %v478, %v430
    %v495 = vmul.f32 %v479, %v431
    %v496 = vmul.f32 %v480, %v432
    %v497 = vmul.f32 %v481, %v433
    %v498 = vmul.f32 %v482, %v434
    %v499 = vmul.f32 %v483, %v435
    %v500 = vmul.f32 %v484, %v436
    %v501 = vmul.f32 %v485, %v437
    %v502 = vmul.f32 %v486, %v438
    %v503 = vmul.f32 %v487, %v439
    %v504 = vmul.f32 %v488, %v440
    %v505 = vmul.f32 %v489, %v441
    %v506 = vmul.f32 %v490, %v442
    %v507 = vmul.f32 %v491, %v443
    %v508 = vld [vmem:[#allocation5] sm:$0xff]
    %v509 = vld [vmem:[#allocation5 + $0x8] sm:$0xff]
    %v510 = vld [vmem:[#allocation5 + $0x10] sm:$0xff]
    %v511 = vld [vmem:[#allocation5 + $0x18] sm:$0xff]
    %v512 = vld [vmem:[#allocation7] sm:$0xff]
    %v513 = vld [vmem:[#allocation7 + $0x8] sm:$0xff]
    %v514 = vld [vmem:[#allocation7 + $0x10] sm:$0xff]
    %v515 = vld [vmem:[#allocation7 + $0x18] sm:$0xff]
    %v517 = vsel %vm91, %v492, 0
    %v520 = vsel %vm91, %v493, 0
    %v523 = vsel %vm91, %v494, 0
    %v526 = vsel %vm91, %v495, 0
    %v529 = vsel %vm91, %v496, 0
    %v532 = vsel %vm91, %v497, 0
    %v535 = vsel %vm91, %v498, 0
    %v538 = vsel %vm91, %v499, 0
    %v541 = vsel %vm91, %v500, 0
    %v544 = vsel %vm91, %v501, 0
    %v547 = vsel %vm91, %v502, 0
    %v550 = vsel %vm91, %v503, 0
    %v553 = vsel %vm91, %v504, 0
    %v556 = vsel %vm91, %v505, 0
    %v559 = vsel %vm91, %v506, 0
    %v562 = vsel %vm91, %v507, 0
    %564 = vmatprep.subr.mxu0 0.0
    %565 = vmatpush1.msra.mxu0 0.0
    %566 = vmatprep.subr.mxu0 0.0
    %567 = vmatpush1.msra.mxu0 0.0
    %568 = vmatprep.subr.mxu0 0.0
    %569 = vmatpush1.msra.mxu0 0.0
    %570 = vmatprep.subr.mxu0 0.0
    %571 = vmatpush1.msra.mxu0 0.0
    %572 = vmatprep.subr.mxu0 0.0
    %573 = vmatpush1.msra.mxu0 0.0
    %574 = vmatprep.subr.mxu0 0.0
    %575 = vmatpush1.msra.mxu0 0.0
    %576 = vmatprep.subr.mxu0 0.0
    %577 = vmatpush1.msra.mxu0 0.0
    %578 = vmatprep.subr.mxu0 0.0
    %579 = vmatpush1.msra.mxu0 0.0
    %580 = vmatprep.subr.mxu0 0.0
    %581 = vmatpush1.msra.mxu0 0.0
    %582 = vmatprep.subr.mxu0 0.0
    %583 = vmatpush1.msra.mxu0 0.0
    %584 = vmatprep.subr.mxu0 0.0
    %585 = vmatpush1.msra.mxu0 0.0
    %586 = vmatprep.subr.mxu0 0.0
    %587 = vmatpush1.msra.mxu0 0.0
    %588 = vmatprep.subr.mxu0 0.0
    %589 = vmatpush1.msra.mxu0 %v515
    %590 = vmatprep.subr.mxu0 0.0
    %591 = vmatpush1.msra.mxu0 %v514
    %592 = vmatprep.subr.mxu0 0.0
    %593 = vmatpush1.msra.mxu0 %v513
    %594 = vmatprep.subr.mxu0 0.0
    %595 = vmatpush1.msra.mxu0 %v512
    %596 = vmatprep.subr.mxu0 0.0
    %597 = vmatpush2.msra.mxu0 0.0
    %598 = vmatprep.subr.mxu0 0.0
    %599 = vmatpush2.msra.mxu0 0.0
    %600 = vmatprep.subr.mxu0 0.0
    %601 = vmatpush2.msra.mxu0 0.0
    %602 = vmatprep.subr.mxu0 0.0
    %603 = vmatpush2.msra.mxu0 0.0
    %604 = vmatprep.subr.mxu0 0.0
    %605 = vmatpush2.msra.mxu0 0.0
    %606 = vmatprep.subr.mxu0 0.0
    %607 = vmatpush2.msra.mxu0 0.0
    %608 = vmatprep.subr.mxu0 0.0
    %609 = vmatpush2.msra.mxu0 0.0
    %610 = vmatprep.subr.mxu0 0.0
    %611 = vmatpush2.msra.mxu0 0.0
    %612 = vmatprep.subr.mxu0 0.0
    %613 = vmatpush2.msra.mxu0 0.0
    %614 = vmatprep.subr.mxu0 0.0
    %615 = vmatpush2.msra.mxu0 0.0
    %616 = vmatprep.subr.mxu0 0.0
    %617 = vmatpush2.msra.mxu0 0.0
    %618 = vmatprep.subr.mxu0 0.0
    %619 = vmatpush2.msra.mxu0 0.0
    %620 = vmatprep.subr.mxu0 0.0
    %621 = vmatpush2.msra.mxu0 0.0
    %622 = vmatprep.subr.mxu0 0.0
    %623 = vmatpush2.msra.mxu0 0.0
    %624 = vmatprep.subr.mxu0 0.0
    %625 = vmatpush2.msra.mxu0 0.0
    %626 = vmatprep.subr.mxu0 0.0
    %627 = vmatpush2.msra.mxu0 0.0
    %628 = vmatprep.mubr.f32.mxu0 0.0
    %629 = vmatmul.mubr.f32.gmra.mxu0 %v517
    %v630 = vpop.f32.mrf.mxu0
    %v631 = vadd.f32 0.0, %v630
    %v632 = vpop.f32.mrf.mxu0
    %633 = vmatprep.mubr.f32.mxu0 0.0
    %634 = vmatmul.mubr.f32.gmra.mxu0 %v520
    %v635 = vpop.f32.mrf.mxu0
    %v636 = vadd.f32 0.0, %v635
    %v637 = vpop.f32.mrf.mxu0
    %638 = vmatprep.mubr.f32.mxu0 0.0
    %639 = vmatmul.mubr.f32.gmra.mxu0 %v523
    %v640 = vpop.f32.mrf.mxu0
    %v641 = vadd.f32 0.0, %v640
    %v642 = vpop.f32.mrf.mxu0
    %643 = vmatprep.mubr.f32.mxu0 0.0
    %644 = vmatmul.mubr.f32.gmra.mxu0 %v526
    %v645 = vpop.f32.mrf.mxu0
    %v646 = vadd.f32 0.0, %v645
    %v647 = vpop.f32.mrf.mxu0
    %648 = vmatprep.mubr.f32.mxu0 0.0
    %649 = vmatmul.mubr.f32.gmra.mxu0 %v529
    %v650 = vpop.f32.mrf.mxu0
    %v651 = vadd.f32 0.0, %v650
    %v652 = vpop.f32.mrf.mxu0
    %653 = vmatprep.mubr.f32.mxu0 0.0
    %654 = vmatmul.mubr.f32.gmra.mxu0 %v532
    %v655 = vpop.f32.mrf.mxu0
    %v656 = vadd.f32 0.0, %v655
    %v657 = vpop.f32.mrf.mxu0
    %658 = vmatprep.mubr.f32.mxu0 0.0
    %659 = vmatmul.mubr.f32.gmra.mxu0 %v535
    %v660 = vpop.f32.mrf.mxu0
    %v661 = vadd.f32 0.0, %v660
    %v662 = vpop.f32.mrf.mxu0
    %663 = vmatprep.mubr.f32.mxu0 0.0
    %664 = vmatmul.mubr.f32.gmra.mxu0 %v538
    %v665 = vpop.f32.mrf.mxu0
    %v666 = vadd.f32 0.0, %v665
    %v667 = vpop.f32.mrf.mxu0
    %668 = vmatprep.mubr.f32.mxu0 0.0
    %669 = vmatmul.mubr.f32.gmra.mxu0 %v541
    %v670 = vpop.f32.mrf.mxu0
    %v671 = vadd.f32 0.0, %v670
    %v672 = vpop.f32.mrf.mxu0
    %673 = vmatprep.mubr.f32.mxu0 0.0
    %674 = vmatmul.mubr.f32.gmra.mxu0 %v544
    %v675 = vpop.f32.mrf.mxu0
    %v676 = vadd.f32 0.0, %v675
    %v677 = vpop.f32.mrf.mxu0
    %678 = vmatprep.mubr.f32.mxu0 0.0
    %679 = vmatmul.mubr.f32.gmra.mxu0 %v547
    %v680 = vpop.f32.mrf.mxu0
    %v681 = vadd.f32 0.0, %v680
    %v682 = vpop.f32.mrf.mxu0
    %683 = vmatprep.mubr.f32.mxu0 0.0
    %684 = vmatmul.mubr.f32.gmra.mxu0 %v550
    %v685 = vpop.f32.mrf.mxu0
    %v686 = vadd.f32 0.0, %v685
    %v687 = vpop.f32.mrf.mxu0
    %688 = vmatprep.mubr.f32.mxu0 0.0
    %689 = vmatmul.mubr.f32.gmra.mxu0 %v553
    %v690 = vpop.f32.mrf.mxu0
    %v691 = vadd.f32 0.0, %v690
    %v692 = vpop.f32.mrf.mxu0
    %693 = vmatprep.mubr.f32.mxu0 0.0
    %694 = vmatmul.mubr.f32.gmra.mxu0 %v556
    %v695 = vpop.f32.mrf.mxu0
    %v696 = vadd.f32 0.0, %v695
    %v697 = vpop.f32.mrf.mxu0
    %698 = vmatprep.mubr.f32.mxu0 0.0
    %699 = vmatmul.mubr.f32.gmra.mxu0 %v559
    %v700 = vpop.f32.mrf.mxu0
    %v701 = vadd.f32 0.0, %v700
    %v702 = vpop.f32.mrf.mxu0
    %703 = vmatprep.mubr.f32.mxu0 0.0
    %704 = vmatmul.mubr.f32.gmra.mxu0 %v562
    %v705 = vpop.f32.mrf.mxu0
    %v706 = vadd.f32 0.0, %v705
    %v707 = vpop.f32.mrf.mxu0
    %708 = vdwg.mxu0
    %v710 = vsel %vm91, %v460, 0
    %v713 = vsel %vm91, %v461, 0
    %v716 = vsel %vm91, %v462, 0
    %v719 = vsel %vm91, %v463, 0
    %v722 = vsel %vm91, %v464, 0
    %v725 = vsel %vm91, %v465, 0
    %v728 = vsel %vm91, %v466, 0
    %v731 = vsel %vm91, %v467, 0
    %v734 = vsel %vm91, %v468, 0
    %v737 = vsel %vm91, %v469, 0
    %v740 = vsel %vm91, %v470, 0
    %v743 = vsel %vm91, %v471, 0
    %v746 = vsel %vm91, %v472, 0
    %v749 = vsel %vm91, %v473, 0
    %v752 = vsel %vm91, %v474, 0
    %v755 = vsel %vm91, %v475, 0
    %757 = vmatprep.subr.mxu0 0.0
    %758 = vmatpush1.msra.mxu0 0.0
    %759 = vmatprep.subr.mxu0 0.0
    %760 = vmatpush1.msra.mxu0 0.0
    %761 = vmatprep.subr.mxu0 0.0
    %762 = vmatpush1.msra.mxu0 0.0
    %763 = vmatprep.subr.mxu0 0.0
    %764 = vmatpush1.msra.mxu0 0.0
    %765 = vmatprep.subr.mxu0 0.0
    %766 = vmatpush1.msra.mxu0 0.0
    %767 = vmatprep.subr.mxu0 0.0
    %768 = vmatpush1.msra.mxu0 0.0
    %769 = vmatprep.subr.mxu0 0.0
    %770 = vmatpush1.msra.mxu0 0.0
    %771 = vmatprep.subr.mxu0 0.0
    %772 = vmatpush1.msra.mxu0 0.0
    %773 = vmatprep.subr.mxu0 0.0
    %774 = vmatpush1.msra.mxu0 0.0
    %775 = vmatprep.subr.mxu0 0.0
    %776 = vmatpush1.msra.mxu0 0.0
    %777 = vmatprep.subr.mxu0 0.0
    %778 = vmatpush1.msra.mxu0 0.0
    %779 = vmatprep.subr.mxu0 0.0
    %780 = vmatpush1.msra.mxu0 0.0
    %781 = vmatprep.subr.mxu0 0.0
    %782 = vmatpush1.msra.mxu0 %v511
    %783 = vmatprep.subr.mxu0 0.0
    %784 = vmatpush1.msra.mxu0 %v510
    %785 = vmatprep.subr.mxu0 0.0
    %786 = vmatpush1.msra.mxu0 %v509
    %787 = vmatprep.subr.mxu0 0.0
    %788 = vmatpush1.msra.mxu0 %v508
    %789 = vmatprep.subr.mxu0 0.0
    %790 = vmatpush2.msra.mxu0 0.0
    %791 = vmatprep.subr.mxu0 0.0
    %792 = vmatpush2.msra.mxu0 0.0
    %793 = vmatprep.subr.mxu0 0.0
    %794 = vmatpush2.msra.mxu0 0.0
    %795 = vmatprep.subr.mxu0 0.0
    %796 = vmatpush2.msra.mxu0 0.0
    %797 = vmatprep.subr.mxu0 0.0
    %798 = vmatpush2.msra.mxu0 0.0
    %799 = vmatprep.subr.mxu0 0.0
    %800 = vmatpush2.msra.mxu0 0.0
    %801 = vmatprep.subr.mxu0 0.0
    %802 = vmatpush2.msra.mxu0 0.0
    %803 = vmatprep.subr.mxu0 0.0
    %804 = vmatpush2.msra.mxu0 0.0
    %805 = vmatprep.subr.mxu0 0.0
    %806 = vmatpush2.msra.mxu0 0.0
    %807 = vmatprep.subr.mxu0 0.0
    %808 = vmatpush2.msra.mxu0 0.0
    %809 = vmatprep.subr.mxu0 0.0
    %810 = vmatpush2.msra.mxu0 0.0
    %811 = vmatprep.subr.mxu0 0.0
    %812 = vmatpush2.msra.mxu0 0.0
    %813 = vmatprep.subr.mxu0 0.0
    %814 = vmatpush2.msra.mxu0 0.0
    %815 = vmatprep.subr.mxu0 0.0
    %816 = vmatpush2.msra.mxu0 0.0
    %817 = vmatprep.subr.mxu0 0.0
    %818 = vmatpush2.msra.mxu0 0.0
    %819 = vmatprep.subr.mxu0 0.0
    %820 = vmatpush2.msra.mxu0 0.0
    %821 = vmatprep.mubr.f32.mxu0 0.0
    %822 = vmatmul.mubr.f32.gmra.mxu0 %v710
    %v823 = vpop.f32.mrf.mxu0
    %v824 = vadd.f32 %v631, %v823
    %v825 = vpop.f32.mrf.mxu0
    %826 = vmatprep.mubr.f32.mxu0 0.0
    %827 = vmatmul.mubr.f32.gmra.mxu0 %v713
    %v828 = vpop.f32.mrf.mxu0
    %v829 = vadd.f32 %v636, %v828
    %v830 = vpop.f32.mrf.mxu0
    %831 = vmatprep.mubr.f32.mxu0 0.0
    %832 = vmatmul.mubr.f32.gmra.mxu0 %v716
    %v833 = vpop.f32.mrf.mxu0
    %v834 = vadd.f32 %v641, %v833
    %v835 = vpop.f32.mrf.mxu0
    %836 = vmatprep.mubr.f32.mxu0 0.0
    %837 = vmatmul.mubr.f32.gmra.mxu0 %v719
    %v838 = vpop.f32.mrf.mxu0
    %v839 = vadd.f32 %v646, %v838
    %v840 = vpop.f32.mrf.mxu0
    %841 = vmatprep.mubr.f32.mxu0 0.0
    %842 = vmatmul.mubr.f32.gmra.mxu0 %v722
    %v843 = vpop.f32.mrf.mxu0
    %v844 = vadd.f32 %v651, %v843
    %v845 = vpop.f32.mrf.mxu0
    %846 = vmatprep.mubr.f32.mxu0 0.0
    %847 = vmatmul.mubr.f32.gmra.mxu0 %v725
    %v848 = vpop.f32.mrf.mxu0
    %v849 = vadd.f32 %v656, %v848
    %v850 = vpop.f32.mrf.mxu0
    %851 = vmatprep.mubr.f32.mxu0 0.0
    %852 = vmatmul.mubr.f32.gmra.mxu0 %v728
    %v853 = vpop.f32.mrf.mxu0
    %v854 = vadd.f32 %v661, %v853
    %v855 = vpop.f32.mrf.mxu0
    %856 = vmatprep.mubr.f32.mxu0 0.0
    %857 = vmatmul.mubr.f32.gmra.mxu0 %v731
    %v858 = vpop.f32.mrf.mxu0
    %v859 = vadd.f32 %v666, %v858
    %v860 = vpop.f32.mrf.mxu0
    %861 = vmatprep.mubr.f32.mxu0 0.0
    %862 = vmatmul.mubr.f32.gmra.mxu0 %v734
    %v863 = vpop.f32.mrf.mxu0
    %v864 = vadd.f32 %v671, %v863
    %v865 = vpop.f32.mrf.mxu0
    %866 = vmatprep.mubr.f32.mxu0 0.0
    %867 = vmatmul.mubr.f32.gmra.mxu0 %v737
    %v868 = vpop.f32.mrf.mxu0
    %v869 = vadd.f32 %v676, %v868
    %v870 = vpop.f32.mrf.mxu0
    %871 = vmatprep.mubr.f32.mxu0 0.0
    %872 = vmatmul.mubr.f32.gmra.mxu0 %v740
    %v873 = vpop.f32.mrf.mxu0
    %v874 = vadd.f32 %v681, %v873
    %v875 = vpop.f32.mrf.mxu0
    %876 = vmatprep.mubr.f32.mxu0 0.0
    %877 = vmatmul.mubr.f32.gmra.mxu0 %v743
    %v878 = vpop.f32.mrf.mxu0
    %v879 = vadd.f32 %v686, %v878
    %v880 = vpop.f32.mrf.mxu0
    %881 = vmatprep.mubr.f32.mxu0 0.0
    %882 = vmatmul.mubr.f32.gmra.mxu0 %v746
    %v883 = vpop.f32.mrf.mxu0
    %v884 = vadd.f32 %v691, %v883
    %v885 = vpop.f32.mrf.mxu0
    %886 = vmatprep.mubr.f32.mxu0 0.0
    %887 = vmatmul.mubr.f32.gmra.mxu0 %v749
    %v888 = vpop.f32.mrf.mxu0
    %v889 = vadd.f32 %v696, %v888
    %v890 = vpop.f32.mrf.mxu0
    %891 = vmatprep.mubr.f32.mxu0 0.0
    %892 = vmatmul.mubr.f32.gmra.mxu0 %v752
    %v893 = vpop.f32.mrf.mxu0
    %v894 = vadd.f32 %v701, %v893
    %v895 = vpop.f32.mrf.mxu0
    %896 = vmatprep.mubr.f32.mxu0 0.0
    %897 = vmatmul.mubr.f32.gmra.mxu0 %v755
    %v898 = vpop.f32.mrf.mxu0
    %v899 = vadd.f32 %v706, %v898
    %v900 = vpop.f32.mrf.mxu0
    %901 = vdwg.mxu0
    %v902 = vld [vmem:[%s3] sm:$0x1]
    %v904 = vlaneseq
    %v905 = vshrl.u32 %v904, 7
    %v906 = vsub.s32 0, %v905
    %v907 = vrot.slane %v902, %v906
    %v909 = vadd.f32 %v824, %v907
    %v910 = vadd.f32 %v829, %v907
    %v911 = vadd.f32 %v834, %v907
    %v912 = vadd.f32 %v839, %v907
    %v913 = vadd.f32 %v844, %v907
    %v914 = vadd.f32 %v849, %v907
    %v915 = vadd.f32 %v854, %v907
    %v916 = vadd.f32 %v859, %v907
    %v917 = vadd.f32 %v864, %v907
    %v918 = vadd.f32 %v869, %v907
    %v919 = vadd.f32 %v874, %v907
    %v920 = vadd.f32 %v879, %v907
    %v921 = vadd.f32 %v884, %v907
    %v922 = vadd.f32 %v889, %v907
    %v923 = vadd.f32 %v894, %v907
    %v924 = vadd.f32 %v899, %v907
    %925 = vst [vmem:[#allocation8] sm:$0xff] %v909
    %926 = vst [vmem:[#allocation8 + $0x8] sm:$0xff] %v910
    %927 = vst [vmem:[#allocation8 + $0x10] sm:$0xff] %v911
    %928 = vst [vmem:[#allocation8 + $0x18] sm:$0xff] %v912
    %929 = vst [vmem:[#allocation8 + $0x20] sm:$0xff] %v913
    %930 = vst [vmem:[#allocation8 + $0x28] sm:$0xff] %v914
    %931 = vst [vmem:[#allocation8 + $0x30] sm:$0xff] %v915
    %932 = vst [vmem:[#allocation8 + $0x38] sm:$0xff] %v916
    %933 = vst [vmem:[#allocation8 + $0x40] sm:$0xff] %v917
    %934 = vst [vmem:[#allocation8 + $0x48] sm:$0xff] %v918
    %935 = vst [vmem:[#allocation8 + $0x50] sm:$0xff] %v919
    %936 = vst [vmem:[#allocation8 + $0x58] sm:$0xff] %v920
    %937 = vst [vmem:[#allocation8 + $0x60] sm:$0xff] %v921
    %938 = vst [vmem:[#allocation8 + $0x68] sm:$0xff] %v922
    %939 = vst [vmem:[#allocation8 + $0x70] sm:$0xff] %v923
    %940 = vst [vmem:[#allocation8 + $0x78] sm:$0xff] %v924
    // Predicated region
    $region30: #{tpu_custom_call.1} parent=1 // pred_check
      _
    $region31: #{tpu_custom_call.1} parent=1 // pred_check_branch
      %942 = sbr.rel (0) target = $region33
    $region32: #{tpu_custom_call.1} parent=1 // pred_region
      %s944 = ssub.s32 2048, 2048
      %945 = vsyncadd [#allocation4], %s944
      %s946 = sshll.u32 [#allocation8], 4
      %s947 = int_to_ptr.vmem [resolvable:$true] %s946
      %952 = dma.vmem_to_hbm [thread:$0]  %s947, 2048, %s4, [#allocation4], 128, 128, 8
    $region33: #{tpu_custom_call.1} parent=1 // pred_fallthru
      _
    // Predicated region
    $region34: #{tpu_custom_call.1} parent=1 // pred_check
      _
    $region35: #{tpu_custom_call.1} parent=1 // pred_check_branch
      %954 = sbr.rel (0) target = $region37
    $region36: #{tpu_custom_call.1} parent=1 // pred_region
      %955 = dma.done [#allocation4], 2048
    $region37: #{tpu_custom_call.1} parent=1 // pred_fallthru
      _
    %956 = vsyncpa [#allocation3], 1
    %957 = vsyncpa [#allocation6], 1
    %958 = vsyncpa [#allocation4], 1

</llo_original>
